<compile_context>
chip_gen: v6e
topology: v6e:2x2x1
jax: 0.10.0
libtpu: 0.0.40
codegen_flags: <defaults>
</compile_context>

<pallas_src>
import functools

import jax
import jax.numpy as jnp
from jax.experimental import pallas as pl
from jax.experimental.pallas import tpu as pltpu


def _round_up(x: int, m: int) -> int:
    return (x + m - 1) // m * m


def _mlp_fused_kernel(*refs, num_layers: int):
    """refs = (x_ref, w0, b0, w1, b1, ..., o_ref).

    Chains Linear(+ReLU) layers entirely in VMEM/vregs:
      bf16 MXU matmul (f32 accumulate) -> f32 bias add -> f32 ReLU -> bf16.
    """
    x_ref, o_ref = refs[0], refs[-1]
    p = refs[1:-1]

    h = x_ref[...].astype(jnp.bfloat16)
    for l in range(num_layers):
        w = p[2 * l][...]                    # (in_p, out_p)  bf16
        b = p[2 * l + 1][...]                # (1, out_p)     f32
        h = jnp.dot(h, w, preferred_element_type=jnp.float32) + b
        if l < num_layers - 1:
            h = jnp.maximum(h, 0.0).astype(jnp.bfloat16)
    o_ref[...] = h.astype(o_ref.dtype)


def prepare_params(params):
    """One-time parameter prep (hoisted out of the per-call path).

    * Hidden (inter-layer) dims are zero-padded to multiples of 128 so the
      intermediate activations / MXU operands are lane-dense; padded entries
      are exactly zero so they contribute nothing through matmul/bias/ReLU.
    * The first layer's contraction dim and the last layer's output dim stay
      unpadded, so x and the output are DMA'd at their true widths.
    * Weights are cast to bf16 AFTER padding (padded entries stay exactly 0);
      biases stay f32 for the f32 VPU epilogue.
    """
    num_layers = len(params)
    prepped = []
    for l, (w, b) in enumerate(params):
        di, do = w.shape
        in_p = di if l == 0 else _round_up(di, 128)
        out_p = do if l == num_layers - 1 else _round_up(do, 128)
        w_p = jnp.zeros((in_p, out_p), jnp.float32).at[:di, :do].set(
            w.astype(jnp.float32))
        b_p = jnp.zeros((1, out_p), jnp.float32).at[0, :do].set(
            b.astype(jnp.float32))
        prepped.append((w_p.astype(jnp.bfloat16), b_p))
    return prepped


def _row_tile_size(n: int, row_tile: int) -> int:
    """Row tile: multiple of 16 (bf16 sublane packing), at most `row_tile`;
    when tiling, prefer an even tile count so v7x's two TensorCores balance."""
    n_aligned = _round_up(max(n, 1), 16)
    if n_aligned <= row_tile:
        return n_aligned
    num_tiles = -(-n_aligned // row_tile)
    if num_tiles % 2:
        num_tiles += 1
    return _round_up(-(-n_aligned // num_tiles), 16)


def mlp_forward(prepped_params, x, *, row_tile: int = 1024):
    """Fused MLP forward.

    prepped_params: output of prepare_params() (padded bf16 W, f32 b).
    x: (N, input_dim), any float dtype; cast to bf16 inside the kernel for the
       MXU (pass bf16 x upstream to also halve the input DMA bytes).
    Returns (N, output_dim) in x's dtype, matching
    nn.Sequential(Linear, ReLU, ..., Linear).
    """
    num_layers = len(prepped_params)
    n, in_dim = x.shape
    assert prepped_params[0][0].shape[0] == in_dim
    out_dim = prepped_params[-1][0].shape[1]

    n_tile = _row_tile_size(n, row_tile)
    grid = (pl.cdiv(n, n_tile),)   # ragged last block handled by Pallas

    # x / output row-tiled at their true feature widths (no HBM padding
    # passes); tiny padded weights & biases fully resident every grid step.
    in_specs = [pl.BlockSpec((n_tile, in_dim), lambda i: (i, 0))]
    flat_params = []
    for w_p, b_p in prepped_params:
        in_specs.append(pl.BlockSpec(w_p.shape, lambda i: (0, 0)))
        in_specs.append(pl.BlockSpec(b_p.shape, lambda i: (0, 0)))
        flat_params += [w_p, b_p]
    out_specs = pl.BlockSpec((n_tile, out_dim), lambda i: (i, 0))

    # Advisory cost hint from the dims actually used.
    flops = 2 * n * sum(int(w.shape[0]) * int(w.shape[1])
                        for w, _ in prepped_params)
    bytes_accessed = (
        n * in_dim * x.dtype.itemsize
        + n * out_dim * x.dtype.itemsize
        + sum(w.size * w.dtype.itemsize + b.size * b.dtype.itemsize
              for w, b in prepped_params))
    cost = pl.CostEstimate(flops=int(flops), transcendentals=0,
                           bytes_accessed=int(bytes_accessed))

    kernel = functools.partial(_mlp_fused_kernel, num_layers=num_layers)
    return pl.pallas_call(
        kernel,
        out_shape=jax.ShapeDtypeStruct((n, out_dim), x.dtype),
        grid=grid,
        in_specs=in_specs,
        out_specs=out_specs,
        compiler_params=pltpu.CompilerParams(
            # Row tiles are independent -> shard across TensorCores.
            # (vmem_limit_bytes only needed on v5e if row_tile grows > ~4096.)
            dimension_semantics=("parallel",),
        ),
        cost_estimate=cost,
    )(x, *flat_params)


def init_mlp_params(key, input_dim, hidden_dim, output_dim, num_layers):
    """Deterministic init mirroring nn.Linear's uniform(-1/sqrt(fan_in), ...).
    Weights stored as (in_dim, out_dim) == transpose of PyTorch's (out, in)."""
    params = []
    for i in range(num_layers):
        in_dim = input_dim if i == 0 else hidden_dim
        out_dim = output_dim if i == num_layers - 1 else hidden_dim
        key, kw, kb = jax.random.split(key, 3)
        bound = 1.0 / float(in_dim) ** 0.5
        w = jax.random.uniform(kw, (in_dim, out_dim), jnp.float32, -bound, bound)
        b = jax.random.uniform(kb, (out_dim,), jnp.float32, -bound, bound)
        params.append((w, b))
    return params


def _ref_forward(params, x, *, bf16_operands=False):
    """Plain-JAX reference. bf16_operands=True mirrors the kernel's dtypes."""
    h = x.astype(jnp.bfloat16) if bf16_operands else x
    for i, (w, b) in enumerate(params):
        wi = w.astype(jnp.bfloat16) if bf16_operands else w
        h = jnp.dot(h, wi, preferred_element_type=jnp.float32) + b
        if i < len(params) - 1:
            h = jnp.maximum(h, 0.0)
            if bf16_operands:
                h = h.astype(jnp.bfloat16)
    return h


if __name__ == "__main__":
    # Small shapes consistent with the module: 8 tokens, input_dim=32,
    # hidden_dim=64, output_dim=16, num_layers=3.
    batch, input_dim, hidden_dim, output_dim, num_layers = 8, 32, 64, 16, 3

    key = jax.random.PRNGKey(0)
    key_x, key_p, key_big = jax.random.split(key, 3)
    x = jax.random.normal(key_x, (batch, input_dim), jnp.float32)
    params = init_mlp_params(key_p, input_dim, hidden_dim, output_dim,
                             num_layers)
    prepped = prepare_params(params)      # one-time prep, reused across calls

    out = mlp_forward(prepped, x)
    jax.block_until_ready(out)
    assert out.shape == (batch, output_dim)

    # Tight check vs a bf16-operand reference (same dtypes as the kernel) and
    # a loose sanity check vs the pure-f32 reference (bf16 rounding ~1e-2).
    ref_bf16 = _ref_forward(params, x, bf16_operands=True)
    ref_f32 = _ref_forward(params, x)
    assert jnp.allclose(out, ref_bf16, atol=2e-3, rtol=2e-3)
    assert jnp.allclose(out, ref_f32, atol=5e-2, rtol=5e-2)

    # Larger, ragged batch: exercises the multi-tile "parallel" grid path
    # (2 row tiles, last block partially out of bounds).
    big_n = 2000
    xb = jax.random.normal(key_big, (big_n, input_dim), jnp.float32)
    outb = mlp_forward(prepped, xb)
    jax.block_until_ready(outb)
    assert outb.shape == (big_n, output_dim)
    assert jnp.allclose(outb, _ref_forward(params, xb, bf16_operands=True),
                        atol=2e-3, rtol=2e-3)

    print("KERNEL_OK")
</pallas_src>

<mosaic_0001>
module attributes {stable_mosaic.version = 11 : i64} {
  func.func @_mlp_fused_kernel(%arg0: i32, %arg1: memref<16x32xf32, #tpu.memory_space<vmem>>, %arg2: memref<32x128xbf16, #tpu.memory_space<vmem>>, %arg3: memref<1x128xf32, #tpu.memory_space<vmem>>, %arg4: memref<128x128xbf16, #tpu.memory_space<vmem>>, %arg5: memref<1x128xf32, #tpu.memory_space<vmem>>, %arg6: memref<128x16xbf16, #tpu.memory_space<vmem>>, %arg7: memref<1x16xf32, #tpu.memory_space<vmem>>, %arg8: memref<16x16xf32, #tpu.memory_space<vmem>>) attributes {dimension_semantics = [#tpu.dimension_semantics<parallel>], iteration_bounds = array<i64: 1>, scalar_prefetch = 0 : i64, scratch_operands = 0 : i64, tpu.core_type = #tpu.core_type<tc>, window_params = [{transform_indices = @transform_0, window_bounds = array<i64: 16, 32>}, {pipeline_mode = #tpu.pipeline_mode<synchronous>, transform_indices = @transform_1, window_bounds = array<i64: 32, 128>}, {pipeline_mode = #tpu.pipeline_mode<synchronous>, transform_indices = @transform_2, window_bounds = array<i64: 1, 128>}, {pipeline_mode = #tpu.pipeline_mode<synchronous>, transform_indices = @transform_3, window_bounds = array<i64: 128, 128>}, {pipeline_mode = #tpu.pipeline_mode<synchronous>, transform_indices = @transform_4, window_bounds = array<i64: 1, 128>}, {pipeline_mode = #tpu.pipeline_mode<synchronous>, transform_indices = @transform_5, window_bounds = array<i64: 128, 16>}, {pipeline_mode = #tpu.pipeline_mode<synchronous>, transform_indices = @transform_6, window_bounds = array<i64: 1, 16>}, {transform_indices = @transform_7, window_bounds = array<i64: 16, 16>}]} {
    %c0 = arith.constant 0 : index
    %c0_0 = arith.constant 0 : index
    %0 = vector.load %arg1[%c0, %c0_0] : memref<16x32xf32, #tpu.memory_space<vmem>>, vector<16x32xf32>
    %1 = arith.truncf %0 : vector<16x32xf32> to vector<16x32xbf16>
    %c0_1 = arith.constant 0 : index
    %c0_2 = arith.constant 0 : index
    %2 = vector.load %arg2[%c0_1, %c0_2] : memref<32x128xbf16, #tpu.memory_space<vmem>>, vector<32x128xbf16>
    %c0_3 = arith.constant 0 : index
    %c0_4 = arith.constant 0 : index
    %3 = vector.load %arg3[%c0_3, %c0_4] : memref<1x128xf32, #tpu.memory_space<vmem>>, vector<1x128xf32>
    %cst = arith.constant dense<0.000000e+00> : vector<16x128xf32>
    %4 = tpu.matmul %1, %2, %cst {dimension_numbers = #tpu.dot_dimension_numbers<[1], [0], [0], [1], [0, 0, 1, 1], [], []>} : vector<16x32xbf16>, vector<32x128xbf16>, vector<16x128xf32> -> vector<16x128xf32>
    %5 = vector.broadcast %3 : vector<1x128xf32> to vector<16x128xf32>
    %6 = arith.addf %4, %5 : vector<16x128xf32>
    %cst_5 = arith.constant 0.000000e+00 : f32
    %7 = vector.broadcast %cst_5 : f32 to vector<16x128xf32>
    %8 = arith.maximumf %6, %7 : vector<16x128xf32>
    %9 = arith.truncf %8 : vector<16x128xf32> to vector<16x128xbf16>
    %c0_6 = arith.constant 0 : index
    %c0_7 = arith.constant 0 : index
    %10 = vector.load %arg4[%c0_6, %c0_7] : memref<128x128xbf16, #tpu.memory_space<vmem>>, vector<128x128xbf16>
    %c0_8 = arith.constant 0 : index
    %c0_9 = arith.constant 0 : index
    %11 = vector.load %arg5[%c0_8, %c0_9] : memref<1x128xf32, #tpu.memory_space<vmem>>, vector<1x128xf32>
    %cst_10 = arith.constant dense<0.000000e+00> : vector<16x128xf32>
    %12 = tpu.matmul %9, %10, %cst_10 {dimension_numbers = #tpu.dot_dimension_numbers<[1], [0], [0], [1], [0, 0, 1, 1], [], []>} : vector<16x128xbf16>, vector<128x128xbf16>, vector<16x128xf32> -> vector<16x128xf32>
    %13 = vector.broadcast %11 : vector<1x128xf32> to vector<16x128xf32>
    %14 = arith.addf %12, %13 : vector<16x128xf32>
    %cst_11 = arith.constant 0.000000e+00 : f32
    %15 = vector.broadcast %cst_11 : f32 to vector<16x128xf32>
    %16 = arith.maximumf %14, %15 : vector<16x128xf32>
    %17 = arith.truncf %16 : vector<16x128xf32> to vector<16x128xbf16>
    %c0_12 = arith.constant 0 : index
    %c0_13 = arith.constant 0 : index
    %18 = vector.load %arg6[%c0_12, %c0_13] : memref<128x16xbf16, #tpu.memory_space<vmem>>, vector<128x16xbf16>
    %c0_14 = arith.constant 0 : index
    %c0_15 = arith.constant 0 : index
    %19 = vector.load %arg7[%c0_14, %c0_15] : memref<1x16xf32, #tpu.memory_space<vmem>>, vector<1x16xf32>
    %cst_16 = arith.constant dense<0.000000e+00> : vector<16x16xf32>
    %20 = tpu.matmul %17, %18, %cst_16 {dimension_numbers = #tpu.dot_dimension_numbers<[1], [0], [0], [1], [0, 0, 1, 1], [], []>} : vector<16x128xbf16>, vector<128x16xbf16>, vector<16x16xf32> -> vector<16x16xf32>
    %21 = vector.broadcast %19 : vector<1x16xf32> to vector<16x16xf32>
    %22 = arith.addf %20, %21 : vector<16x16xf32>
    %c0_17 = arith.constant 0 : index
    %c0_18 = arith.constant 0 : index
    %23 = vector.load %arg8[%c0_17, %c0_18] : memref<16x16xf32, #tpu.memory_space<vmem>>, vector<16x16xf32>
    tpu.vector_store %arg8[%c0_17, %c0_18], %22 {strides = array<i32>} : memref<16x16xf32, #tpu.memory_space<vmem>>, vector<16x16xf32>,
    return
  }
  func.func @transform_0(%arg0: i32) -> (i32, i32) {
    %c0_i32 = arith.constant 0 : i32
    %c0_i32_0 = arith.constant 0 : i32
    return %arg0, %c0_i32 : i32, i32
  }
  func.func @transform_1(%arg0: i32) -> (i32, i32) {
    %c0_i32 = arith.constant 0 : i32
    %c0_i32_0 = arith.constant 0 : i32
    %c0_i32_1 = arith.constant 0 : i32
    return %c0_i32, %c0_i32_0 : i32, i32
  }
  func.func @transform_2(%arg0: i32) -> (i32, i32) {
    %c0_i32 = arith.constant 0 : i32
    %c0_i32_0 = arith.constant 0 : i32
    %c0_i32_1 = arith.constant 0 : i32
    return %c0_i32, %c0_i32_0 : i32, i32
  }
  func.func @transform_3(%arg0: i32) -> (i32, i32) {
    %c0_i32 = arith.constant 0 : i32
    %c0_i32_0 = arith.constant 0 : i32
    %c0_i32_1 = arith.constant 0 : i32
    return %c0_i32, %c0_i32_0 : i32, i32
  }
  func.func @transform_4(%arg0: i32) -> (i32, i32) {
    %c0_i32 = arith.constant 0 : i32
    %c0_i32_0 = arith.constant 0 : i32
    %c0_i32_1 = arith.constant 0 : i32
    return %c0_i32, %c0_i32_0 : i32, i32
  }
  func.func @transform_5(%arg0: i32) -> (i32, i32) {
    %c0_i32 = arith.constant 0 : i32
    %c0_i32_0 = arith.constant 0 : i32
    %c0_i32_1 = arith.constant 0 : i32
    return %c0_i32, %c0_i32_0 : i32, i32
  }
  func.func @transform_6(%arg0: i32) -> (i32, i32) {
    %c0_i32 = arith.constant 0 : i32
    %c0_i32_0 = arith.constant 0 : i32
    %c0_i32_1 = arith.constant 0 : i32
    return %c0_i32, %c0_i32_0 : i32, i32
  }
  func.func @transform_7(%arg0: i32) -> (i32, i32) {
    %c0_i32 = arith.constant 0 : i32
    %c0_i32_0 = arith.constant 0 : i32
    return %arg0, %c0_i32 : i32, i32
  }
}

</mosaic_0001>

<llo_original>
// kernel: tpu_custom_call.1
$region0: #{tpu_custom_call.1}
  #allocation0 [shape = 'u32[]', space=smem, size = 0x4, offset = 0x4, fixed_abs, tag = 'smem constant byte address 0x4 - core index']
  #allocation1 [shape = 'u32[144,128]{1,0:T(1,128)}', space=vmem, size = 0x12000, scoped, tag = 'internal scratch']
  %s0 = inlined_call_operand.vmem [shape: f32[8,32], index: 0, kind: input, shape index: {}]
  %s1 = inlined_call_operand.hbm [shape: bf16[32,128], index: 1, kind: input, shape index: {}]
  %s2 = inlined_call_operand.vmem [shape: f32[1,128], index: 2, kind: input, shape index: {}]
  %s3 = inlined_call_operand.vmem [shape: bf16[128,128], index: 3, kind: input, shape index: {}]
  %s4 = inlined_call_operand.hbm [shape: f32[1,128], index: 4, kind: input, shape index: {}]
  %s5 = inlined_call_operand.vmem [shape: bf16[128,16], index: 5, kind: input, shape index: {}]
  %s6 = inlined_call_operand.vmem [shape: f32[1,16], index: 6, kind: input, shape index: {}]
  %s7 = inlined_call_operand.hbm [shape: f32[8,16], index: 7, kind: output, shape index: {}]
  %s8 = sld [smem:[#allocation0]]
  $region46: #{tpu_custom_call.1} parent=0
    _
  %s10 = ssub.s32 1, %s8
  %s11 = scalar_select 0, %s10, %s8
  $region1: #{tpu_custom_call.1} parent=0
    #allocation2 [shape = 'u8[8192]{0}', space=vmem, size = 0x2000, scoped, tag = 'input window, operand 1, single buffered']
    #allocation3 [shape = 's32[1]{0}', space=sflag, size = 0x4, scoped, tag = 'scoped memory for tpu_custom_call.1']
    #allocation4 [shape = 's32[1]{0}', space=sflag, size = 0x4, scoped, tag = 'scoped memory for tpu_custom_call.1']
    #allocation5 [shape = 'u8[512]{0}', space=vmem, size = 0x400, scoped, tag = 'input window, operand 4, single buffered']
    #allocation6 [shape = 's32[1]{0}', space=sflag, size = 0x4, scoped, tag = 'scoped memory for tpu_custom_call.1']
    #allocation7 [shape = 'u8[8192]{0}', space=vmem, size = 0x2000, scoped, tag = 'output window, operand 0, single buffered']
    %12 = vsyncpa [#allocation3], 0
    %13 = vsyncpa [#allocation6], 0
    %14 = vsyncpa [#allocation4], 0
    // Predicated region
    $region2: #{tpu_custom_call.1} parent=1 // pred_check
      _
    $region3: #{tpu_custom_call.1} parent=1 // pred_check_branch
      %16 = sbr.rel (0) target = $region5
    $region4: #{tpu_custom_call.1} parent=1 // pred_region
      _
    $region5: #{tpu_custom_call.1} parent=1 // pred_fallthru
      _
    // Predicated region
    $region6: #{tpu_custom_call.1} parent=1 // pred_check
      _
    $region7: #{tpu_custom_call.1} parent=1 // pred_check_branch
      %18 = sbr.rel (0) target = $region9
    $region8: #{tpu_custom_call.1} parent=1 // pred_region
      %s20 = ssub.s32 256, 256
      %21 = vsyncadd [#allocation3], %s20
      %s22 = sshll.u32 [#allocation2], 4
      %s23 = int_to_ptr.vmem [resolvable:$true] %s22
      %28 = dma.hbm_to_vmem [thread:$0]  %s1, 256, %s23, [#allocation3], 64, 64, 4
    $region9: #{tpu_custom_call.1} parent=1 // pred_fallthru
      _
    // Predicated region
    $region10: #{tpu_custom_call.1} parent=1 // pred_check
      _
    $region11: #{tpu_custom_call.1} parent=1 // pred_check_branch
      %30 = sbr.rel (0) target = $region13
    $region12: #{tpu_custom_call.1} parent=1 // pred_region
      _
    $region13: #{tpu_custom_call.1} parent=1 // pred_fallthru
      _
    // Predicated region
    $region14: #{tpu_custom_call.1} parent=1 // pred_check
      _
    $region15: #{tpu_custom_call.1} parent=1 // pred_check_branch
      %32 = sbr.rel (0) target = $region17
    $region16: #{tpu_custom_call.1} parent=1 // pred_region
      _
    $region17: #{tpu_custom_call.1} parent=1 // pred_fallthru
      _
    // Predicated region
    $region18: #{tpu_custom_call.1} parent=1 // pred_check
      _
    $region19: #{tpu_custom_call.1} parent=1 // pred_check_branch
      %34 = sbr.rel (0) target = $region21
    $region20: #{tpu_custom_call.1} parent=1 // pred_region
      %s36 = ssub.s32 16, 16
      %37 = vsyncadd [#allocation6], %s36
      %s39 = sshll.u32 [#allocation5], 4
      %s40 = int_to_ptr.vmem [resolvable:$true] %s39
      %42 = dma.hbm_to_vmem [thread:$0]  %s4, 16, %s40, [#allocation6]
    $region21: #{tpu_custom_call.1} parent=1 // pred_fallthru
      _
    // Predicated region
    $region22: #{tpu_custom_call.1} parent=1 // pred_check
      _
    $region23: #{tpu_custom_call.1} parent=1 // pred_check_branch
      %44 = sbr.rel (0) target = $region25
    $region24: #{tpu_custom_call.1} parent=1 // pred_region
      _
    $region25: #{tpu_custom_call.1} parent=1 // pred_fallthru
      _
    // Predicated region
    $region26: #{tpu_custom_call.1} parent=1 // pred_check
      _
    $region27: #{tpu_custom_call.1} parent=1 // pred_check_branch
      %46 = sbr.rel (0) target = $region29
    $region28: #{tpu_custom_call.1} parent=1 // pred_region
      _
    $region29: #{tpu_custom_call.1} parent=1 // pred_fallthru
      _
    // Predicated region
    $region30: #{tpu_custom_call.1} parent=1 // pred_check
      _
    $region31: #{tpu_custom_call.1} parent=1 // pred_check_branch
      %48 = sbr.rel (0) target = $region33
    $region32: #{tpu_custom_call.1} parent=1 // pred_region
      %49 = dma.done [#allocation3], 256
    $region33: #{tpu_custom_call.1} parent=1 // pred_fallthru
      _
    // Predicated region
    $region34: #{tpu_custom_call.1} parent=1 // pred_check
      _
    $region35: #{tpu_custom_call.1} parent=1 // pred_check_branch
      %51 = sbr.rel (0) target = $region37
    $region36: #{tpu_custom_call.1} parent=1 // pred_region
      %52 = dma.done [#allocation6], 16
    $region37: #{tpu_custom_call.1} parent=1 // pred_fallthru
      _
    %v54 = vld [vmem:[%s0] sm:$0xff]
    %v55 = vld [vmem:[%s0 + $0x8] sm:$0xff]
    %v56 = vpack.c.bf16 %v55, %v54
    %v57 = vld [vmem:[#allocation2] sm:$0xf]
    %v58 = vld [vmem:[#allocation2 + $0x4] sm:$0xf]
    %v59 = vld [vmem:[#allocation2 + $0x8] sm:$0xf]
    %v60 = vld [vmem:[#allocation2 + $0xc] sm:$0xf]
    %v61 = vld [vmem:[%s2] sm:$0x1]
    %v63 = vlaneseq
    %v64 = vshrl.u32 %v63, 7
    %v65 = vsub.s32 0, %v64
    %v66 = vrot.slane %v61, %v65
    %v72 = vunpack.c.l.b16 %v57
    %v73 = vunpack.c.l.b16 %v58
    %v74 = vunpack.c.l.b16 %v59
    %v75 = vunpack.c.l.b16 %v60
    %v76 = vpack.c.b16 %v73, %v72
    %v77 = vpack.c.b16 %v75, %v74
    %vm80 = vcmask 261120
    %v82 = vsel %vm80, %v56, 0
    %84 = vmatprep.subr.bf16.mxu0 0
    %85 = vmatpush1.bf16.msra.mxu0 0
    %86 = vmatprep.subr.bf16.mxu0 0
    %87 = vmatpush1.bf16.msra.mxu0 0
    %88 = vmatprep.subr.bf16.mxu0 0
    %89 = vmatpush1.bf16.msra.mxu0 0
    %90 = vmatprep.subr.bf16.mxu0 0
    %91 = vmatpush1.bf16.msra.mxu0 0
    %92 = vmatprep.subr.bf16.mxu0 0
    %93 = vmatpush1.bf16.msra.mxu0 0
    %94 = vmatprep.subr.bf16.mxu0 0
    %95 = vmatpush1.bf16.msra.mxu0 0
    %96 = vmatprep.subr.bf16.mxu0 0
    %97 = vmatpush1.bf16.msra.mxu0 %v77
    %98 = vmatprep.subr.bf16.mxu0 0
    %99 = vmatpush1.bf16.msra.mxu0 %v76
    %100 = vmatprep.subr.bf16.mxu0 0
    %101 = vmatpush2.bf16.msra.mxu0 0
    %102 = vmatprep.subr.bf16.mxu0 0
    %103 = vmatpush2.bf16.msra.mxu0 0
    %104 = vmatprep.subr.bf16.mxu0 0
    %105 = vmatpush2.bf16.msra.mxu0 0
    %106 = vmatprep.subr.bf16.mxu0 0
    %107 = vmatpush2.bf16.msra.mxu0 0
    %108 = vmatprep.subr.bf16.mxu0 0
    %109 = vmatpush2.bf16.msra.mxu0 0
    %110 = vmatprep.subr.bf16.mxu0 0
    %111 = vmatpush2.bf16.msra.mxu0 0
    %112 = vmatprep.subr.bf16.mxu0 0
    %113 = vmatpush2.bf16.msra.mxu0 0
    %114 = vmatprep.subr.bf16.mxu0 0
    %115 = vmatpush2.bf16.msra.mxu0 0
    %116 = vmatprep.mubr.bf16.mxu0 0
    %117 = vmatmul.mubr.bf16.gmra.mxu0 %v82
    %v118 = vpop.f32.mrf.mxu0
    %v119 = vadd.f32 %v66, %v118
    %v120 = vpop.f32.mrf.mxu0
    %v121 = vpop.f32.mrf.mxu0
    %v122 = vadd.f32 %v66, %v121
    %v123 = vpop.f32.mrf.mxu0
    %124 = vdwg.mxu0
    %v125 = vmax.f32 %v119, 0.0
    %v126 = vmax.f32 %v122, 0.0
    %v127 = vpack.c.bf16 %v126, %v125
    %v128 = vld [vmem:[%s3] sm:$0xf]
    %v129 = vld [vmem:[%s3 + $0x4] sm:$0xf]
    %v130 = vld [vmem:[%s3 + $0x8] sm:$0xf]
    %v131 = vld [vmem:[%s3 + $0xc] sm:$0xf]
    %v132 = vld [vmem:[%s3 + $0x10] sm:$0xf]
    %v133 = vld [vmem:[%s3 + $0x14] sm:$0xf]
    %v134 = vld [vmem:[%s3 + $0x18] sm:$0xf]
    %v135 = vld [vmem:[%s3 + $0x1c] sm:$0xf]
    %v136 = vld [vmem:[%s3 + $0x20] sm:$0xf]
    %v137 = vld [vmem:[%s3 + $0x24] sm:$0xf]
    %v138 = vld [vmem:[%s3 + $0x28] sm:$0xf]
    %v139 = vld [vmem:[%s3 + $0x2c] sm:$0xf]
    %v140 = vld [vmem:[%s3 + $0x30] sm:$0xf]
    %v141 = vld [vmem:[%s3 + $0x34] sm:$0xf]
    %v142 = vld [vmem:[%s3 + $0x38] sm:$0xf]
    %v143 = vld [vmem:[%s3 + $0x3c] sm:$0xf]
    %v144 = vld [vmem:[#allocation5] sm:$0x1]
    %v146 = vlaneseq
    %v147 = vshrl.u32 %v146, 7
    %v148 = vsub.s32 0, %v147
    %v149 = vrot.slane %v144, %v148
    %v167 = vunpack.c.l.b16 %v128
    %v168 = vunpack.c.l.b16 %v129
    %v169 = vunpack.c.l.b16 %v130
    %v170 = vunpack.c.l.b16 %v131
    %v171 = vunpack.c.l.b16 %v132
    %v172 = vunpack.c.l.b16 %v133
    %v173 = vunpack.c.l.b16 %v134
    %v174 = vunpack.c.l.b16 %v135
    %v175 = vunpack.c.l.b16 %v136
    %v176 = vunpack.c.l.b16 %v137
    %v177 = vunpack.c.l.b16 %v138
    %v178 = vunpack.c.l.b16 %v139
    %v179 = vunpack.c.l.b16 %v140
    %v180 = vunpack.c.l.b16 %v141
    %v181 = vunpack.c.l.b16 %v142
    %v182 = vunpack.c.l.b16 %v143
    %v183 = vpack.c.b16 %v168, %v167
    %v184 = vpack.c.b16 %v170, %v169
    %v185 = vpack.c.b16 %v172, %v171
    %v186 = vpack.c.b16 %v174, %v173
    %v187 = vpack.c.b16 %v176, %v175
    %v188 = vpack.c.b16 %v178, %v177
    %v189 = vpack.c.b16 %v180, %v179
    %v190 = vpack.c.b16 %v182, %v181
    %199 = vmatprep.subr.bf16.mxu0 0
    %200 = vmatpush1.bf16.msra.mxu0 %v190
    %201 = vmatprep.subr.bf16.mxu0 0
    %202 = vmatpush1.bf16.msra.mxu0 %v189
    %203 = vmatprep.subr.bf16.mxu0 0
    %204 = vmatpush1.bf16.msra.mxu0 %v188
    %205 = vmatprep.subr.bf16.mxu0 0
    %206 = vmatpush1.bf16.msra.mxu0 %v187
    %207 = vmatprep.subr.bf16.mxu0 0
    %208 = vmatpush1.bf16.msra.mxu0 %v186
    %209 = vmatprep.subr.bf16.mxu0 0
    %210 = vmatpush1.bf16.msra.mxu0 %v185
    %211 = vmatprep.subr.bf16.mxu0 0
    %212 = vmatpush1.bf16.msra.mxu0 %v184
    %213 = vmatprep.subr.bf16.mxu0 0
    %214 = vmatpush1.bf16.msra.mxu0 %v183
    %215 = vmatprep.subr.bf16.mxu0 0
    %216 = vmatpush2.bf16.msra.mxu0 0
    %217 = vmatprep.subr.bf16.mxu0 0
    %218 = vmatpush2.bf16.msra.mxu0 0
    %219 = vmatprep.subr.bf16.mxu0 0
    %220 = vmatpush2.bf16.msra.mxu0 0
    %221 = vmatprep.subr.bf16.mxu0 0
    %222 = vmatpush2.bf16.msra.mxu0 0
    %223 = vmatprep.subr.bf16.mxu0 0
    %224 = vmatpush2.bf16.msra.mxu0 0
    %225 = vmatprep.subr.bf16.mxu0 0
    %226 = vmatpush2.bf16.msra.mxu0 0
    %227 = vmatprep.subr.bf16.mxu0 0
    %228 = vmatpush2.bf16.msra.mxu0 0
    %229 = vmatprep.subr.bf16.mxu0 0
    %230 = vmatpush2.bf16.msra.mxu0 0
    %231 = vmatprep.mubr.bf16.mxu0 0
    %232 = vmatmul.mubr.bf16.gmra.mxu0 %v127
    %v233 = vpop.f32.mrf.mxu0
    %v234 = vadd.f32 %v149, %v233
    %v235 = vpop.f32.mrf.mxu0
    %v236 = vpop.f32.mrf.mxu0
    %v237 = vadd.f32 %v149, %v236
    %v238 = vpop.f32.mrf.mxu0
    %239 = vdwg.mxu0
    %v240 = vmax.f32 %v234, 0.0
    %v241 = vmax.f32 %v237, 0.0
    %v242 = vpack.c.bf16 %v241, %v240
    %v243 = vld [vmem:[%s5] sm:$0xf]
    %v244 = vld [vmem:[%s5 + $0x4] sm:$0xf]
    %v245 = vld [vmem:[%s5 + $0x8] sm:$0xf]
    %v246 = vld [vmem:[%s5 + $0xc] sm:$0xf]
    %v247 = vld [vmem:[%s5 + $0x10] sm:$0xf]
    %v248 = vld [vmem:[%s5 + $0x14] sm:$0xf]
    %v249 = vld [vmem:[%s5 + $0x18] sm:$0xf]
    %v250 = vld [vmem:[%s5 + $0x1c] sm:$0xf]
    %v251 = vld [vmem:[%s5 + $0x20] sm:$0xf]
    %v252 = vld [vmem:[%s5 + $0x24] sm:$0xf]
    %v253 = vld [vmem:[%s5 + $0x28] sm:$0xf]
    %v254 = vld [vmem:[%s5 + $0x2c] sm:$0xf]
    %v255 = vld [vmem:[%s5 + $0x30] sm:$0xf]
    %v256 = vld [vmem:[%s5 + $0x34] sm:$0xf]
    %v257 = vld [vmem:[%s5 + $0x38] sm:$0xf]
    %v258 = vld [vmem:[%s5 + $0x3c] sm:$0xf]
    %v259 = vld [vmem:[%s6] sm:$0x1]
    %v261 = vlaneseq
    %v262 = vshrl.u32 %v261, 7
    %v263 = vsub.s32 0, %v262
    %v264 = vrot.slane %v259, %v263
    %v282 = vunpack.c.l.b16 %v243
    %v283 = vunpack.c.l.b16 %v244
    %v284 = vunpack.c.l.b16 %v245
    %v285 = vunpack.c.l.b16 %v246
    %v286 = vunpack.c.l.b16 %v247
    %v287 = vunpack.c.l.b16 %v248
    %v288 = vunpack.c.l.b16 %v249
    %v289 = vunpack.c.l.b16 %v250
    %v290 = vunpack.c.l.b16 %v251
    %v291 = vunpack.c.l.b16 %v252
    %v292 = vunpack.c.l.b16 %v253
    %v293 = vunpack.c.l.b16 %v254
    %v294 = vunpack.c.l.b16 %v255
    %v295 = vunpack.c.l.b16 %v256
    %v296 = vunpack.c.l.b16 %v257
    %v297 = vunpack.c.l.b16 %v258
    %v298 = vpack.c.b16 %v283, %v282
    %v299 = vpack.c.b16 %v285, %v284
    %v300 = vpack.c.b16 %v287, %v286
    %v301 = vpack.c.b16 %v289, %v288
    %v302 = vpack.c.b16 %v291, %v290
    %v303 = vpack.c.b16 %v293, %v292
    %v304 = vpack.c.b16 %v295, %v294
    %v305 = vpack.c.b16 %v297, %v296
    %314 = vmatprep.subr.bf16.mxu0 0
    %315 = vmatpush1.bf16.msra.mxu0 %v305
    %316 = vmatprep.subr.bf16.mxu0 0
    %317 = vmatpush1.bf16.msra.mxu0 %v304
    %318 = vmatprep.subr.bf16.mxu0 0
    %319 = vmatpush1.bf16.msra.mxu0 %v303
    %320 = vmatprep.subr.bf16.mxu0 0
    %321 = vmatpush1.bf16.msra.mxu0 %v302
    %322 = vmatprep.subr.bf16.mxu0 0
    %323 = vmatpush1.bf16.msra.mxu0 %v301
    %324 = vmatprep.subr.bf16.mxu0 0
    %325 = vmatpush1.bf16.msra.mxu0 %v300
    %326 = vmatprep.subr.bf16.mxu0 0
    %327 = vmatpush1.bf16.msra.mxu0 %v299
    %328 = vmatprep.subr.bf16.mxu0 0
    %329 = vmatpush1.bf16.msra.mxu0 %v298
    %330 = vmatprep.subr.bf16.mxu0 0
    %331 = vmatpush2.bf16.msra.mxu0 0
    %332 = vmatprep.subr.bf16.mxu0 0
    %333 = vmatpush2.bf16.msra.mxu0 0
    %334 = vmatprep.subr.bf16.mxu0 0
    %335 = vmatpush2.bf16.msra.mxu0 0
    %336 = vmatprep.subr.bf16.mxu0 0
    %337 = vmatpush2.bf16.msra.mxu0 0
    %338 = vmatprep.subr.bf16.mxu0 0
    %339 = vmatpush2.bf16.msra.mxu0 0
    %340 = vmatprep.subr.bf16.mxu0 0
    %341 = vmatpush2.bf16.msra.mxu0 0
    %342 = vmatprep.subr.bf16.mxu0 0
    %343 = vmatpush2.bf16.msra.mxu0 0
    %344 = vmatprep.subr.bf16.mxu0 0
    %345 = vmatpush2.bf16.msra.mxu0 0
    %346 = vmatprep.mubr.bf16.mxu0 0
    %347 = vmatmul.mubr.bf16.gmra.mxu0 %v242
    %v348 = vpop.f32.mrf.mxu0
    %v349 = vadd.f32 %v264, %v348
    %v350 = vpop.f32.mrf.mxu0
    %v351 = vpop.f32.mrf.mxu0
    %v352 = vadd.f32 %v264, %v351
    %v353 = vpop.f32.mrf.mxu0
    %354 = vdwg.mxu0
    %vm355 = vcmask 130048
    %356 = vst.msk [vmem:[#allocation7] sm:$0xff] %vm355, %v349
    %357 = vst.msk [vmem:[#allocation7 + $0x8] sm:$0xff] %vm355, %v352
    // Predicated region
    $region38: #{tpu_custom_call.1} parent=1 // pred_check
      _
    $region39: #{tpu_custom_call.1} parent=1 // pred_check_branch
      %359 = sbr.rel (0) target = $region41
    $region40: #{tpu_custom_call.1} parent=1 // pred_region
      %s361 = ssub.s32 256, 128
      %362 = vsyncadd [#allocation4], %s361
      %s363 = sshll.u32 [#allocation7], 4
      %s364 = int_to_ptr.vmem [resolvable:$true] %s363
      %369 = dma.vmem_to_hbm [thread:$0]  %s364, 128, %s7, [#allocation4], 128, 128, 8
    $region41: #{tpu_custom_call.1} parent=1 // pred_fallthru
      _
    // Predicated region
    $region42: #{tpu_custom_call.1} parent=1 // pred_check
      _
    $region43: #{tpu_custom_call.1} parent=1 // pred_check_branch
      %371 = sbr.rel (0) target = $region45
    $region44: #{tpu_custom_call.1} parent=1 // pred_region
      %372 = dma.done [#allocation4], 256
    $region45: #{tpu_custom_call.1} parent=1 // pred_fallthru
      _
    %373 = vsyncpa [#allocation3], 1
    %374 = vsyncpa [#allocation6], 1
    %375 = vsyncpa [#allocation4], 1

</llo_original>
